<compile_context>
chip_gen: v6e
topology: v6e:2x2x1
jax: 0.10.0
libtpu: 0.0.40
codegen_flags: <defaults>
</compile_context>

<pallas_src>
import math

import jax
import jax.numpy as jnp
from jax.experimental import pallas as pl
from jax.experimental.pallas import tpu as pltpu

_CLIP_MIN = 1e-6
_IS_SUM = 1
_POS_ALPHA = 1e-3


# ----------------------------------------------------------------------------
# Pallas kernel 1: fused one-hot + sigmoid + mask + clip
#   probs = sigmoid(logits) * mask + CLIP ;  vlab = onehot(new_targets)[c] * mask
# ----------------------------------------------------------------------------
def _make_prep_kernel(num_classes, upper_ids, lower_ids):
    def kernel(logit_ref, label_ref, mask_ref, prob_ref, vlab_ref):
        c = pl.program_id(1)                       # channel of new_targets
        lab = label_ref[...]                       # (1, HW) int32 raw label (255 = void)
        m = mask_ref[...]                          # (1, HW) f32 valid mask

        is_void = lab == 255
        t_leaf = jnp.where(is_void, 0, lab)
        in_upper = lab == upper_ids[0]
        for u in upper_ids[1:]:
            in_upper = in_upper | (lab == u)
        in_lower = lab == lower_ids[0]
        for l in lower_ids[1:]:
            in_lower = in_lower | (lab == l)
        t_mid = jnp.where(in_upper, 1, jnp.where(in_lower, 2, 0))
        t_top = jnp.where((lab > 0) & jnp.logical_not(is_void), 1, 0)

        is_leaf = c < num_classes
        is_mid = jnp.logical_and(c >= num_classes, c < num_classes + 3)
        tgt = jnp.where(is_leaf, t_leaf, jnp.where(is_mid, t_mid, t_top))
        idx = jnp.where(is_leaf, c,
                        jnp.where(is_mid, c - num_classes, c - num_classes - 3))
        onehot = (tgt == idx).astype(jnp.float32)

        prob_ref[...] = jax.nn.sigmoid(logit_ref[...]) * m + _CLIP_MIN
        vlab_ref[...] = onehot * m

    return kernel


def prep_probs_labels(logits_4d, label_3d, mask_3d, num_classes, upper_ids, lower_ids):
    """logits: (N, Ctot, H, W) f32; label: (N, H, W) int; mask: (N, H, W) bool/float.
    Returns (probs, valid_onehot_labels), both (N, Ctot, H, W) f32."""
    N, C, H, W = logits_4d.shape
    HW = H * W
    lg = logits_4d.reshape(N, C, 1, HW).astype(jnp.float32)
    lb = label_3d.reshape(N, 1, HW).astype(jnp.int32)
    mk = mask_3d.reshape(N, 1, HW).astype(jnp.float32)

    chan_spec = pl.BlockSpec((None, None, 1, HW), lambda n, c: (n, c, 0, 0))
    map_spec = pl.BlockSpec((None, 1, HW), lambda n, c: (n, 0, 0))   # reused across c

    probs, vlab = pl.pallas_call(
        _make_prep_kernel(num_classes, tuple(upper_ids), tuple(lower_ids)),
        out_shape=(jax.ShapeDtypeStruct((N, C, 1, HW), jnp.float32),
                   jax.ShapeDtypeStruct((N, C, 1, HW), jnp.float32)),
        grid=(N, C),
        in_specs=[chan_spec, map_spec, map_spec],
        out_specs=(chan_spec, chan_spec),
        compiler_params=pltpu.CompilerParams(
            dimension_semantics=("parallel", "parallel"),
            vmem_limit_bytes=48 * 1024 * 1024),
    )(lg, lb, mk)
    return probs.reshape(N, C, H, W), vlab.reshape(N, C, H, W)


# ----------------------------------------------------------------------------
# Pallas kernel 2: fused pair-extraction + mean-centering + single Gram matmul.
#   Per batch element:  X = [la_windows; pr_windows]  (18, M_valid)  ->  G = X @ X^T
#   la_cov = G[:9,:9], pr_cov = G[9:,9:], la_pr_cov = G[:9,9:]
# TB batch elements are stacked into one (TB*18, L) operand so the MXU rows fill up;
# only the TB diagonal 18x18 blocks of the big Gram are kept.
# ----------------------------------------------------------------------------
def _make_cov_kernel(radius, Hp, Wp, TB):
    half_d = radius * radius
    D = 2 * half_d
    nh = Hp - (radius - 1)
    nw = Wp - (radius - 1)
    L = (nh - 1) * Wp + nw          # contiguous flat-slice length covering one window
    M = nh * nw                     # true number of window positions

    def kernel(la_ref, pr_ref, cov_ref):
        # la_ref / pr_ref: (TB, 1, Hp*Wp) f32 ;  cov_ref: (TB, D, D) f32
        rows = []
        for tb in range(TB):
            for ref in (la_ref, pr_ref):
                for y in range(radius):
                    for x in range(radius):
                        o = y * Wp + x
                        rows.append(ref[tb, :, o:o + L])      # (1, L) static lane slice
        X = jnp.concatenate(rows, axis=0)                     # (TB*D, L)

        # columns with (k mod Wp) >= nw are row-wrap positions -> masked to zero
        col = jax.lax.broadcasted_iota(jnp.int32, (1, L), 1)
        valid = ((col % Wp) < nw).astype(jnp.float32)         # same mask for every row
        mean = jnp.sum(X * valid, axis=1, keepdims=True) * (1.0 / M)
        Xc = (X - mean) * valid

        # one Gram matmul instead of 3 small ones; cross-batch blocks are discarded.
        G = jax.lax.dot_general(Xc, Xc, (((1,), (1,)), ((), ())),
                                preferred_element_type=jnp.float32)
        for tb in range(TB):
            cov_ref[tb] = G[tb * D:(tb + 1) * D, tb * D:(tb + 1) * D]

    return kernel


def cov_pallas(la_pool, pr_pool, radius):
    """la_pool / pr_pool: (B, Hp, Wp) f32 pooled maps.
    Returns (B, 2*half_d, 2*half_d) Gram of the mean-centred shifted windows."""
    B, Hp, Wp = la_pool.shape
    half_d = radius * radius
    D = 2 * half_d
    nh, nw = Hp - (radius - 1), Wp - (radius - 1)
    L = (nh - 1) * Wp + nw
    flat = Hp * Wp

    # Fill MXU rows: ~256/D problems per grid step; shrink if the in-kernel working
    # set would blow a conservative VMEM budget (v7x has only 64 MiB physical).
    TB = max(1, min(B, 256 // D))

    def vmem_est(tb):
        r = tb * D
        return 4 * (2 * 2 * tb * flat + 3 * r * L + r * r + 2 * tb * D * D)

    while TB > 1 and vmem_est(TB) > 24 * 1024 * 1024:
        TB -= 1
    # TODO(synk): for very large pooled maps at TB==1, add an M-chunked accumulation
    #             grid axis ("arbitrary") with a VMEM scratch instead of shrinking more.

    Bp = ((B + TB - 1) // TB) * TB
    la = la_pool.reshape(B, 1, flat).astype(jnp.float32)
    pr = pr_pool.reshape(B, 1, flat).astype(jnp.float32)
    if Bp != B:
        pad = jnp.zeros((Bp - B, 1, flat), jnp.float32)
        la = jnp.concatenate([la, pad], axis=0)
        pr = jnp.concatenate([pr, pad], axis=0)

    in_spec = pl.BlockSpec((TB, 1, flat), lambda i: (i, 0, 0))
    out_spec = pl.BlockSpec((TB, D, D), lambda i: (i, 0, 0))
    cov = pl.pallas_call(
        _make_cov_kernel(radius, Hp, Wp, TB),
        out_shape=jax.ShapeDtypeStruct((Bp, D, D), jnp.float32),
        grid=(Bp // TB,),
        in_specs=[in_spec, in_spec],
        out_specs=out_spec,
        compiler_params=pltpu.CompilerParams(
            dimension_semantics=("parallel",),
            vmem_limit_bytes=48 * 1024 * 1024),
    )(la, pr)
    return cov[:B]


# ----------------------------------------------------------------------------
# JAX glue (pooling, small linear algebra, auxiliary losses)
# ----------------------------------------------------------------------------
def _max_pool2d(x, kernel, stride, pad):
    # x: (B, H, W); matches F.max_pool2d (floor output size, -inf padding).
    return jax.lax.reduce_window(
        x, jnp.array(-jnp.inf, x.dtype), jax.lax.max,
        window_dimensions=(1, kernel, kernel),
        window_strides=(1, stride, stride),
        padding=((0, 0), (pad, pad), (pad, pad)))


def cross_entropy_loss(logits, target, ignore_index=255):
    # TODO(synk): mmseg CrossEntropyLoss source not provided; standard mean CE with ignore=255.
    valid = target != ignore_index
    t = jnp.where(valid, target, 0)
    logp = jax.nn.log_softmax(logits.astype(jnp.float32), axis=1)
    nll = -jnp.take_along_axis(logp, t[:, None, :, :], axis=1)[:, 0]
    nll = jnp.where(valid, nll, 0.0)
    return nll.sum() / jnp.maximum(valid.sum(), 1).astype(jnp.float32)


def prepare_targets(label, upper_ids, lower_ids):
    # TODO(synk): prepare_targets source not provided; hierarchy: 0=bg, upper_ids->1,
    #             lower_ids->2 at the middle level; bg/foreground at the top level.
    is_void = label == 255
    mid = jnp.zeros_like(label)
    for u in upper_ids:
        mid = jnp.where(label == u, 1, mid)
    for l in lower_ids:
        mid = jnp.where(label == l, 2, mid)
    top = jnp.where((label > 0) & (~is_void), 1, 0)
    return label, mid, top


def losses_hiera_focal(cls_score, targets, targets_middle, targets_top,
                       num_classes, upper_ids, lower_ids, gamma=2.0, eps=1e-8):
    # TODO(synk): losses_hiera_focal source not provided; best-effort HSSN focal tree-min loss.
    s = jax.nn.sigmoid(cls_score.astype(jnp.float32))
    void = targets == 255
    t = jnp.where(void, 0, targets)
    y_leaf = jax.nn.one_hot(t, num_classes, axis=1, dtype=jnp.float32)
    y_mid = jax.nn.one_hot(targets_middle, 3, axis=1, dtype=jnp.float32)
    y_top = jax.nn.one_hot(targets_top, 2, axis=1, dtype=jnp.float32)

    s_leaf = s[:, :num_classes]
    s_mid = s[:, num_classes:num_classes + 3]
    s_top = s[:, num_classes + 3:]

    leaf_parent = jnp.array([0] + [1 if i in upper_ids else 2 for i in range(1, num_classes)])
    mid_parent = jnp.array([0, 1, 1])

    mcl_mid = jnp.minimum(s_mid, s_top[:, mid_parent])
    mcl_leaf = jnp.minimum(s_leaf, mcl_mid[:, leaf_parent])
    mcl_top = s_top

    mcm_leaf = s_leaf
    mcm_mid = jnp.stack([
        jnp.maximum(s_mid[:, 0], s_leaf[:, 0]),
        jnp.maximum(s_mid[:, 1], jnp.max(s_leaf[:, jnp.array(upper_ids)], axis=1)),
        jnp.maximum(s_mid[:, 2], jnp.max(s_leaf[:, jnp.array(lower_ids)], axis=1)),
    ], axis=1)
    mcm_top = jnp.stack([
        jnp.maximum(s_top[:, 0], mcm_mid[:, 0]),
        jnp.maximum(s_top[:, 1], jnp.max(mcm_mid[:, 1:], axis=1)),
    ], axis=1)

    valid = (~void)[:, None, :, :].astype(jnp.float32)

    def focal(y, mcl, mcm):
        return -(y * (1.0 - mcl) ** gamma * jnp.log(mcl + eps)
                 + (1.0 - y) * mcm ** gamma * jnp.log(1.0 - mcm + eps))

    num_valid = jnp.maximum(valid.sum(), 1.0)
    total = ((focal(y_leaf, mcl_leaf, mcm_leaf) * valid).sum()
             + (focal(y_mid, mcl_mid, mcm_mid) * valid).sum()
             + (focal(y_top, mcl_top, mcm_top) * valid).sum())
    return total / num_valid / float(num_classes + 5)


def _nearest_resize_labels(labels, out_h, out_w):
    N, H, W = labels.shape
    rows = (jnp.arange(out_h) * H) // out_h
    cols = (jnp.arange(out_w) * W) // out_w
    return labels[:, rows][:, :, cols]


def tree_triplet_loss(feats, label, num_classes, upper_ids, lower_ids, max_triplet=200):
    # TODO(synk): data-dependent boolean indexing emulated with fixed-size stable argsort gather.
    N, D, Hf, Wf = feats.shape
    lab = _nearest_resize_labels(label, Hf, Wf).reshape(-1)
    f = jnp.transpose(feats, (0, 2, 3, 1)).reshape(-1, D).astype(jnp.float32)

    def first_k(mask):
        order = jnp.argsort((~mask).astype(jnp.int32), stable=True)
        return order[:max_triplet]

    total = jnp.float32(0.0)
    count = jnp.float32(0.0)
    for ii in range(1, num_classes):            # exist classes exclude 0 and 255
        if ii in upper_ids:
            pos_ids = [p for p in upper_ids if p != ii]
            neg_ids = list(lower_ids)
        else:
            pos_ids = [p for p in lower_ids if p != ii]
            neg_ids = list(upper_ids)
        m_a = lab == ii
        m_p = jnp.zeros_like(m_a)
        for p in pos_ids:
            m_p = m_p | (lab == p)
        m_n = jnp.zeros_like(m_a)
        for q in neg_ids:
            m_n = m_n | (lab == q)
        c_a, c_p, c_n = m_a.sum(), m_p.sum(), m_n.sum()
        min_size = jnp.minimum(jnp.minimum(c_a, c_p), jnp.minimum(c_n, max_triplet)).astype(jnp.int32)

        fa = f[first_k(m_a)]
        fp = f[first_k(m_p)]
        fn = f[first_k(m_n)]
        d_pos = 1.0 - jnp.sum(fa * fp, axis=1)
        d_neg = 1.0 - jnp.sum(fa * fn, axis=1)
        tl = jax.nn.relu(d_pos - d_neg + 0.6)
        valid = (jnp.arange(max_triplet) < min_size).astype(jnp.float32)
        has = min_size > 0
        mean_tl = jnp.where(has,
                            (tl * valid).sum() / jnp.maximum(min_size, 1).astype(jnp.float32),
                            0.0)
        total = total + mean_tl
        count = count + has.astype(jnp.float32)
    triplet = jnp.where(count > 0, total / jnp.maximum(count, 1.0), 0.0)
    return triplet, count


# ----------------------------------------------------------------------------
# The loss module
# ----------------------------------------------------------------------------
class RMIHieraTripletLossPallas:
    def __init__(self, use_sigmoid=False, num_classes=7, rmi_radius=3, rmi_pool_way=0,
                 rmi_pool_size=3, rmi_pool_stride=3, loss_weight_lambda=0.5, loss_weight=1.0):
        assert rmi_radius in range(1, 11)
        assert rmi_pool_way == 0, "only rmi_pool_way=0 (max-pool) implemented"
        assert rmi_pool_size == rmi_pool_stride
        self.use_sigmoid = use_sigmoid
        self.num_classes = num_classes
        self.rmi_radius = rmi_radius
        self.rmi_pool_way = rmi_pool_way
        self.rmi_pool_size = rmi_pool_size
        self.rmi_pool_stride = rmi_pool_stride
        if num_classes > 15:
            self.upper_ids = [1, 2, 3, 4, 5, 6, 7, 10, 11, 13, 14, 15]
            self.lower_ids = [8, 9, 12, 16, 17, 18, 19]
        else:
            self.upper_ids = [1, 2, 3, 4]
            self.lower_ids = [5, 6]
        self.weight_lambda = loss_weight_lambda
        self.loss_weight = loss_weight
        self.half_d = rmi_radius * rmi_radius
        self.d = 2 * self.half_d
        self.kernel_padding = rmi_pool_size // 2

    # ---------------- RMI ----------------
    def forward_sigmoid(self, logits_4d, label_3d, label_mask_3d, num_classes):
        probs_4d, valid_labels_4d = prep_probs_labels(
            logits_4d, label_3d, label_mask_3d, num_classes, self.upper_ids, self.lower_ids)
        rmi = self.rmi_lower_bound(valid_labels_4d, probs_4d, num_classes)
        return rmi * self.weight_lambda

    def rmi_lower_bound(self, labels_4d, probs_4d, num_classes):
        # TODO(synk): reference computes this block in float64; f32 used on TPU.
        N, C, H, W = labels_4d.shape
        lab = labels_4d.reshape(N * C, H, W)
        prob = probs_4d.reshape(N * C, H, W)
        if self.rmi_pool_stride > 1:
            lab = _max_pool2d(lab, self.rmi_pool_size, self.rmi_pool_stride, self.kernel_padding)
            prob = _max_pool2d(prob, self.rmi_pool_size, self.rmi_pool_stride, self.kernel_padding)

        cov = cov_pallas(lab, prob, self.rmi_radius)             # (N*C, 2h, 2h) Pallas hot path
        hd = self.half_d
        la_cov = cov[:, :hd, :hd]
        pr_cov = cov[:, hd:, hd:]
        la_pr_cov = cov[:, :hd, hd:]

        eye = jnp.eye(hd, dtype=jnp.float32)
        pr_cov_inv = jnp.linalg.inv(pr_cov + eye * _POS_ALPHA)
        appro_var = la_cov - la_pr_cov @ pr_cov_inv @ jnp.swapaxes(la_pr_cov, -1, -2)
        chol = jnp.linalg.cholesky(appro_var + eye * _POS_ALPHA)
        logdet = 2.0 * jnp.sum(jnp.log(jnp.diagonal(chol, axis1=-2, axis2=-1) + 1e-8), axis=-1)
        rmi_now = 0.5 * logdet                                   # (N*C,)
        rmi_per_class = rmi_now.reshape(N, num_classes + 5).mean(axis=0) / float(hd)
        return jnp.sum(rmi_per_class) if _IS_SUM else jnp.mean(rmi_per_class)

    # ---------------- forward ----------------
    def __call__(self, step, embedding, cls_score_before, cls_score, label, weight=None, **kwargs):
        targets, targets_middle, targets_top = prepare_targets(label, self.upper_ids, self.lower_ids)
        hiera_loss = losses_hiera_focal(cls_score, targets, targets_middle, targets_top,
                                        self.num_classes, self.upper_ids, self.lower_ids)

        void_indices = targets == 255
        targets_z = jnp.where(void_indices, 0, targets)
        # Faithful to the reference: valid_indices computed AFTER zeroing voids -> all True.
        valid_indices = targets_z != 255

        # The leaf/middle/top one-hot (new_targets) is built inside the Pallas prep
        # kernel from the raw int label -> no (N, C, H, W) one-hot materialisation.
        rmi_loss = self.forward_sigmoid(cls_score, label, valid_indices, self.num_classes)
        ce_loss2 = cross_entropy_loss(cls_score[:, -5:-2], targets_middle)
        ce_loss3 = cross_entropy_loss(cls_score[:, -2:], targets_top)
        loss = 0.5 * rmi_loss + 0.5 * hiera_loss + ce_loss2 + ce_loss3

        loss_triplet, class_count = tree_triplet_loss(
            embedding, label, self.num_classes, self.upper_ids, self.lower_ids)
        # torch.distributed.all_gather with world_size == 1.
        all_step = 160000 if len(self.upper_ids) > 5 else 60000
        if step < all_step:
            factor = 0.25 * (1.0 + math.cos((step - all_step) / all_step * math.pi))
        else:
            factor = 0.5
        loss = loss + jnp.where(class_count > 0, factor * loss_triplet, 0.0)
        return loss


# ----------------------------------------------------------------------------
# demo
# ----------------------------------------------------------------------------
if __name__ == "__main__":
    key = jax.random.PRNGKey(0)
    N, H, W = 2, 16, 16
    num_classes = 7
    C_total = num_classes + 5           # 7 leaves + 3 middle + 2 top = 12
    emb_dim = 32

    k1, k2, k3, k4 = jax.random.split(key, 4)
    embedding = jax.random.normal(k1, (N, emb_dim, H, W), jnp.float32)
    embedding = embedding / jnp.linalg.norm(embedding, axis=1, keepdims=True)
    cls_score = jax.random.normal(k2, (N, C_total, H, W), jnp.float32)
    cls_score_before = jax.random.normal(k3, (N, C_total, H, W), jnp.float32)
    label = jax.random.randint(k4, (N, H, W), 0, num_classes).astype(jnp.int32)
    label = label.at[:, 0, 0].set(255)  # a couple of void pixels

    loss_mod = RMIHieraTripletLossPallas(num_classes=num_classes)
    loss = loss_mod(step=30000, embedding=embedding, cls_score_before=cls_score_before,
                    cls_score=cls_score, label=label)
    loss = jax.block_until_ready(loss)
    assert bool(jnp.isfinite(loss)), f"non-finite loss: {loss}"
    print("KERNEL_OK")
</pallas_src>

<mosaic_0001>
module attributes {stable_mosaic.version = 11 : i64} {
  func.func @kernel(%arg0: i32, %arg1: i32, %arg2: memref<1x1x1x256xf32, #tpu.memory_space<vmem>>, %arg3: memref<1x1x256xi32, #tpu.memory_space<vmem>>, %arg4: memref<1x1x256xf32, #tpu.memory_space<vmem>>, %arg5: memref<1x1x1x256xf32, #tpu.memory_space<vmem>>, %arg6: memref<1x1x1x256xf32, #tpu.memory_space<vmem>>) attributes {dimension_semantics = [#tpu.dimension_semantics<parallel>, #tpu.dimension_semantics<parallel>], iteration_bounds = array<i64: 2, 12>, scalar_prefetch = 0 : i64, scratch_operands = 0 : i64, tpu.core_type = #tpu.core_type<tc>, window_params = [{transform_indices = @transform_0, window_bounds = array<i64: 1, 1, 1, 256>}, {transform_indices = @transform_1, window_bounds = array<i64: 1, 1, 256>}, {transform_indices = @transform_2, window_bounds = array<i64: 1, 1, 256>}, {transform_indices = @transform_3, window_bounds = array<i64: 1, 1, 1, 256>}, {transform_indices = @transform_4, window_bounds = array<i64: 1, 1, 1, 256>}]} {
    %c0 = arith.constant 0 : index
    %c0_0 = arith.constant 0 : index
    %c0_1 = arith.constant 0 : index
    %0 = vector.load %arg3[%c0, %c0_0, %c0_1] : memref<1x1x256xi32, #tpu.memory_space<vmem>>, vector<1x1x256xi32>
    %1 = vector.shape_cast %0 : vector<1x1x256xi32> to vector<1x256xi32>
    %c0_2 = arith.constant 0 : index
    %c0_3 = arith.constant 0 : index
    %c0_4 = arith.constant 0 : index
    %2 = vector.load %arg4[%c0_2, %c0_3, %c0_4] : memref<1x1x256xf32, #tpu.memory_space<vmem>>, vector<1x1x256xf32>
    %3 = vector.shape_cast %2 : vector<1x1x256xf32> to vector<1x256xf32>
    %c255_i32 = arith.constant 255 : i32
    %4 = vector.broadcast %c255_i32 : i32 to vector<1x256xi32>
    %5 = arith.cmpi eq, %1, %4 : vector<1x256xi32>
    %c0_i32 = arith.constant 0 : i32
    %6 = vector.broadcast %c0_i32 : i32 to vector<1x256xi32>
    %7 = arith.select %5, %6, %1 : vector<1x256xi1>, vector<1x256xi32>
    %c1_i32 = arith.constant 1 : i32
    %8 = vector.broadcast %c1_i32 : i32 to vector<1x256xi32>
    %9 = arith.cmpi eq, %1, %8 : vector<1x256xi32>
    %c2_i32 = arith.constant 2 : i32
    %10 = vector.broadcast %c2_i32 : i32 to vector<1x256xi32>
    %11 = arith.cmpi eq, %1, %10 : vector<1x256xi32>
    %12 = arith.ori %9, %11 : vector<1x256xi1>
    %c3_i32 = arith.constant 3 : i32
    %13 = vector.broadcast %c3_i32 : i32 to vector<1x256xi32>
    %14 = arith.cmpi eq, %1, %13 : vector<1x256xi32>
    %15 = arith.ori %12, %14 : vector<1x256xi1>
    %c4_i32 = arith.constant 4 : i32
    %16 = vector.broadcast %c4_i32 : i32 to vector<1x256xi32>
    %17 = arith.cmpi eq, %1, %16 : vector<1x256xi32>
    %18 = arith.ori %15, %17 : vector<1x256xi1>
    %c5_i32 = arith.constant 5 : i32
    %19 = vector.broadcast %c5_i32 : i32 to vector<1x256xi32>
    %20 = arith.cmpi eq, %1, %19 : vector<1x256xi32>
    %c6_i32 = arith.constant 6 : i32
    %21 = vector.broadcast %c6_i32 : i32 to vector<1x256xi32>
    %22 = arith.cmpi eq, %1, %21 : vector<1x256xi32>
    %23 = arith.ori %20, %22 : vector<1x256xi1>
    %c2_i32_5 = arith.constant 2 : i32
    %c0_i32_6 = arith.constant 0 : i32
    %24 = vector.broadcast %c2_i32_5 : i32 to vector<1x256xi32>
    %25 = vector.broadcast %c0_i32_6 : i32 to vector<1x256xi32>
    %26 = arith.select %23, %24, %25 : vector<1x256xi1>, vector<1x256xi32>
    %c1_i32_7 = arith.constant 1 : i32
    %27 = vector.broadcast %c1_i32_7 : i32 to vector<1x256xi32>
    %28 = arith.select %18, %27, %26 : vector<1x256xi1>, vector<1x256xi32>
    %c0_i32_8 = arith.constant 0 : i32
    %29 = vector.broadcast %c0_i32_8 : i32 to vector<1x256xi32>
    %30 = arith.cmpi sgt, %1, %29 : vector<1x256xi32>
    %cst = arith.constant dense<true> : vector<1x256xi1>
    %31 = arith.xori %5, %cst : vector<1x256xi1>
    %32 = arith.andi %30, %31 : vector<1x256xi1>
    %c1_i32_9 = arith.constant 1 : i32
    %c0_i32_10 = arith.constant 0 : i32
    %33 = vector.broadcast %c1_i32_9 : i32 to vector<1x256xi32>
    %34 = vector.broadcast %c0_i32_10 : i32 to vector<1x256xi32>
    %35 = arith.select %32, %33, %34 : vector<1x256xi1>, vector<1x256xi32>
    %c7_i32 = arith.constant 7 : i32
    %36 = arith.cmpi slt, %arg1, %c7_i32 : i32
    %c7_i32_11 = arith.constant 7 : i32
    %37 = arith.cmpi sge, %arg1, %c7_i32_11 : i32
    %c10_i32 = arith.constant 10 : i32
    %38 = arith.cmpi slt, %arg1, %c10_i32 : i32
    %39 = arith.andi %37, %38 : i1
    %40 = arith.select %39, %28, %35 : vector<1x256xi32>
    %41 = arith.select %36, %7, %40 : vector<1x256xi32>
    %c7_i32_12 = arith.constant 7 : i32
    %42 = arith.subi %arg1, %c7_i32_12 : i32
    %c7_i32_13 = arith.constant 7 : i32
    %43 = arith.subi %arg1, %c7_i32_13 : i32
    %c3_i32_14 = arith.constant 3 : i32
    %44 = arith.subi %43, %c3_i32_14 : i32
    %45 = arith.select %39, %42, %44 : i32
    %46 = arith.select %36, %arg1, %45 : i32
    %47 = vector.broadcast %46 : i32 to vector<1x256xi32>
    %48 = arith.cmpi eq, %41, %47 : vector<1x256xi32>
    %49 = arith.extui %48 : vector<1x256xi1> to vector<1x256xi32>
    %50 = arith.sitofp %49 : vector<1x256xi32> to vector<1x256xf32>
    %c0_15 = arith.constant 0 : index
    %c0_16 = arith.constant 0 : index
    %c0_17 = arith.constant 0 : index
    %c0_18 = arith.constant 0 : index
    %51 = vector.load %arg2[%c0_15, %c0_16, %c0_17, %c0_18] : memref<1x1x1x256xf32, #tpu.memory_space<vmem>>, vector<1x1x1x256xf32>
    %52 = vector.shape_cast %51 : vector<1x1x1x256xf32> to vector<1x256xf32>
    %53 = arith.negf %52 : vector<1x256xf32>
    %54 = math.exp %53 : vector<1x256xf32>
    %cst_19 = arith.constant 1.000000e+00 : f32
    %55 = vector.broadcast %cst_19 : f32 to vector<1x256xf32>
    %56 = arith.addf %55, %54 : vector<1x256xf32>
    %57 = arith.divf %55, %56 : vector<1x256xf32>
    %58 = arith.mulf %57, %3 : vector<1x256xf32>
    %cst_20 = arith.constant 9.99999997E-7 : f32
    %59 = vector.broadcast %cst_20 : f32 to vector<1x256xf32>
    %60 = arith.addf %58, %59 : vector<1x256xf32>
    %c0_21 = arith.constant 0 : index
    %c0_22 = arith.constant 0 : index
    %c0_23 = arith.constant 0 : index
    %c0_24 = arith.constant 0 : index
    %61 = vector.load %arg5[%c0_21, %c0_22, %c0_23, %c0_24] : memref<1x1x1x256xf32, #tpu.memory_space<vmem>>, vector<1x1x1x256xf32>
    %62 = vector.shape_cast %61 : vector<1x1x1x256xf32> to vector<1x256xf32>
    %63 = vector.shape_cast %60 : vector<1x256xf32> to vector<1x1x1x256xf32>
    tpu.vector_store %arg5[%c0_21, %c0_22, %c0_23, %c0_24], %63 {strides = array<i32>} : memref<1x1x1x256xf32, #tpu.memory_space<vmem>>, vector<1x1x1x256xf32>,
    %64 = arith.mulf %50, %3 : vector<1x256xf32>
    %c0_25 = arith.constant 0 : index
    %c0_26 = arith.constant 0 : index
    %c0_27 = arith.constant 0 : index
    %c0_28 = arith.constant 0 : index
    %65 = vector.load %arg6[%c0_25, %c0_26, %c0_27, %c0_28] : memref<1x1x1x256xf32, #tpu.memory_space<vmem>>, vector<1x1x1x256xf32>
    %66 = vector.shape_cast %65 : vector<1x1x1x256xf32> to vector<1x256xf32>
    %67 = vector.shape_cast %64 : vector<1x256xf32> to vector<1x1x1x256xf32>
    tpu.vector_store %arg6[%c0_25, %c0_26, %c0_27, %c0_28], %67 {strides = array<i32>} : memref<1x1x1x256xf32, #tpu.memory_space<vmem>>, vector<1x1x1x256xf32>,
    return
  }
  func.func @transform_0(%arg0: i32, %arg1: i32) -> (i32, i32, i32, i32) {
    %c0_i32 = arith.constant 0 : i32
    %c0_i32_0 = arith.constant 0 : i32
    %c0_i32_1 = arith.constant 0 : i32
    return %arg0, %arg1, %c0_i32, %c0_i32_0 : i32, i32, i32, i32
  }
  func.func @transform_1(%arg0: i32, %arg1: i32) -> (i32, i32, i32) {
    %c0_i32 = arith.constant 0 : i32
    %c0_i32_0 = arith.constant 0 : i32
    %c0_i32_1 = arith.constant 0 : i32
    return %arg0, %c0_i32, %c0_i32_0 : i32, i32, i32
  }
  func.func @transform_2(%arg0: i32, %arg1: i32) -> (i32, i32, i32) {
    %c0_i32 = arith.constant 0 : i32
    %c0_i32_0 = arith.constant 0 : i32
    %c0_i32_1 = arith.constant 0 : i32
    return %arg0, %c0_i32, %c0_i32_0 : i32, i32, i32
  }
  func.func @transform_3(%arg0: i32, %arg1: i32) -> (i32, i32, i32, i32) {
    %c0_i32 = arith.constant 0 : i32
    %c0_i32_0 = arith.constant 0 : i32
    %c0_i32_1 = arith.constant 0 : i32
    return %arg0, %arg1, %c0_i32, %c0_i32_0 : i32, i32, i32, i32
  }
  func.func @transform_4(%arg0: i32, %arg1: i32) -> (i32, i32, i32, i32) {
    %c0_i32 = arith.constant 0 : i32
    %c0_i32_0 = arith.constant 0 : i32
    %c0_i32_1 = arith.constant 0 : i32
    return %arg0, %arg1, %c0_i32, %c0_i32_0 : i32, i32, i32, i32
  }
}

</mosaic_0001>

<llo_original>
// kernel: tpu_custom_call.1
$region0: #{tpu_custom_call.1}
  #allocation0 [shape = 'u32[]', space=smem, size = 0x4, offset = 0x4, fixed_abs, tag = 'smem constant byte address 0x4 - core index']
  #allocation1 [shape = 'u32[144,128]{1,0:T(1,128)}', space=vmem, size = 0x12000, scoped, tag = 'internal scratch']
  %s0 = inlined_call_operand.hbm [shape: f32[2,12,1,256], index: 0, kind: input, shape index: {}]
  %s1 = inlined_call_operand.hbm [shape: s32[2,1,256], index: 1, kind: input, shape index: {}]
  %s2 = inlined_call_operand.hbm [shape: f32[2,1,256], index: 2, kind: input, shape index: {}]
  %s3 = inlined_call_operand.hbm [shape: f32[2,12,1,256], index: 3, kind: output, shape index: {0}]
  %s4 = inlined_call_operand.hbm [shape: f32[2,12,1,256], index: 4, kind: output, shape index: {1}]
  %5 = xla_tuple %s3, %s4
  %s6 = sld [smem:[#allocation0]]
  $region65: #{tpu_custom_call.1} parent=0
    _
  %s8 = ssub.s32 1, %s6
  %s9 = scalar_select 0, %s8, %s6
  $region1: #{tpu_custom_call.1} parent=0
    #allocation2 [shape = 'u8[2048]{0}', space=vmem, size = 0x800, scoped, tag = 'input window, operand 0']
    #allocation3 [shape = 's32[2]{0}', space=sflag, size = 0x8, scoped, tag = 'scoped memory for tpu_custom_call.1']
    #allocation4 [shape = 's32[2]{0}', space=sflag, size = 0x8, scoped, tag = 'scoped memory for tpu_custom_call.1']
    #allocation5 [shape = 'u8[2048]{0}', space=vmem, size = 0x800, scoped, tag = 'input window, operand 1']
    #allocation6 [shape = 's32[2]{0}', space=sflag, size = 0x8, scoped, tag = 'scoped memory for tpu_custom_call.1']
    #allocation7 [shape = 'u8[2048]{0}', space=vmem, size = 0x800, scoped, tag = 'input window, operand 2']
    #allocation8 [shape = 'u8[2048]{0}', space=vmem, size = 0x800, scoped, tag = 'output window, operand 0']
    #allocation9 [shape = 'u8[2048]{0}', space=vmem, size = 0x800, scoped, tag = 'output window, operand 1']
    #allocation10 [shape = 's32[2]{0}', space=sflag, size = 0x8, scoped, tag = 'scoped memory for tpu_custom_call.1']
    %10 = vsyncpa [#allocation3], 0
    %s11 = scalar_lea.sflag [#allocation3], 1
    %12 = vsyncpa %s11, 0
    %13 = vsyncpa [#allocation6], 0
    %s14 = scalar_lea.sflag [#allocation6], 1
    %15 = vsyncpa %s14, 0
    %16 = vsyncpa [#allocation4], 0
    %s17 = scalar_lea.sflag [#allocation4], 1
    %18 = vsyncpa %s17, 0
    %19 = vsyncpa [#allocation10], 0
    %s20 = scalar_lea.sflag [#allocation10], 1
    %21 = vsyncpa %s20, 0
    loop: start=0, step=1, limit=26
    $region2: #{tpu_custom_call.1} parent=1 // loop_pre_header
      _
    $region3: #{tpu_custom_call.1} parent=1 // loop_header
      %s23 = sphi 0, %s27
      %p24 = scmp.ge.s32.totalorder %s23, 26
      %s30 = sphi 0, %s42
      %s31 = sphi 0, %s38
      %s32 = sphi 0, %s30
      %s33 = sphi 0, %s31
      %s34 = sphi 0, %s32
      %s35 = sphi 0, %s33
      %s47 = sphi 0, %s49
      %s50 = sphi 0, %s47
      %s51 = sphi 0, %s50
      %s67 = sphi 0, %s51
      %s73 = sphi 0, %s75
      %s76 = sphi 0, %s73
      %s77 = sphi 0, %s76
      %s93 = sphi 0, %s77
      %s99 = sphi 0, %s101
      %s102 = sphi 0, %s99
      %s103 = sphi 0, %s102
      %s119 = sphi 0, %s103
      %s127 = sphi 0, %s129
      %s130 = sphi 0, %s127
      %s131 = sphi 0, %s130
      %s147 = sphi 0, %s131
      %s155 = sphi 0, %s157
      %s158 = sphi 0, %s155
      %s159 = sphi 0, %s158
      %s175 = sphi 0, %s159
    $region4: #{tpu_custom_call.1} parent=1 // loop_header_branch
      %26 = sbr.rel (%p24) target = $region8
    $region5: #{tpu_custom_call.1} parent=1 // loop_body
      %s28 = ssub.s32 %s23, 1
      %s29 = ssub.s32 %s23, 2
      %s36 = sadd.s32 1, %s31
      %p37 = scmp.ge.s32.totalorder %s36, 12
      %s38 = scalar_select %p37, 0, %s36
      %s39 = sadd.s32 1, %s30
      %s40 = scalar_select %p37, %s39, %s30
      %p41 = scmp.ge.s32.totalorder %s40, 2
      %s42 = scalar_select %p41, 0, %s40
      %s43 = ssub.s32 %s30, %s42
      %s44 = ssub.s32 %s31, %s38
      %s45 = sor.u32 %s43, %s44
      %p46 = scmp.eq.s32.totalorder %s45, 0
      %s48 = sadd.s32 %s47, 1
      %s49 = scalar_select %p46, %s47, %s48
      %p52 = pneg %p46
      %p53 = scmp.eq.s32.totalorder %s23, 23
      %p54 = por %p52, %p53
      %p55 = scmp.ne.s32.totalorder %s47, %s50
      %p56 = scmp.eq.s32.totalorder %s23, 0
      %p57 = por %p55, %p56
      %p58 = scmp.ne.s32.totalorder %s47, %s50
      %p59 = scmp.eq.s32.totalorder %s28, 23
      %p60 = por %p58, %p59
      %p61 = scmp.ne.s32.totalorder %s50, %s51
      %p62 = scmp.eq.s32.totalorder %s28, 0
      %p63 = por %p61, %p62
      %p64 = scmp.ne.s32.totalorder %s50, %s51
      %p65 = scmp.eq.s32.totalorder %s29, 23
      %p66 = por %p64, %p65
      %p68 = scmp.ne.s32.totalorder %s51, %s67
      %p69 = scmp.eq.s32.totalorder %s29, 0
      %p70 = por %p68, %p69
      %s71 = ssub.s32 %s30, %s42
      %p72 = scmp.eq.s32.totalorder %s71, 0
      %s74 = sadd.s32 %s73, 1
      %s75 = scalar_select %p72, %s73, %s74
      %p78 = pneg %p72
      %p79 = scmp.eq.s32.totalorder %s23, 23
      %p80 = por %p78, %p79
      %p81 = scmp.ne.s32.totalorder %s73, %s76
      %p82 = scmp.eq.s32.totalorder %s23, 0
      %p83 = por %p81, %p82
      %p84 = scmp.ne.s32.totalorder %s73, %s76
      %p85 = scmp.eq.s32.totalorder %s28, 23
      %p86 = por %p84, %p85
      %p87 = scmp.ne.s32.totalorder %s76, %s77
      %p88 = scmp.eq.s32.totalorder %s28, 0
      %p89 = por %p87, %p88
      %p90 = scmp.ne.s32.totalorder %s76, %s77
      %p91 = scmp.eq.s32.totalorder %s29, 23
      %p92 = por %p90, %p91
      %p94 = scmp.ne.s32.totalorder %s77, %s93
      %p95 = scmp.eq.s32.totalorder %s29, 0
      %p96 = por %p94, %p95
      %s97 = ssub.s32 %s30, %s42
      %p98 = scmp.eq.s32.totalorder %s97, 0
      %s100 = sadd.s32 %s99, 1
      %s101 = scalar_select %p98, %s99, %s100
      %p104 = pneg %p98
      %p105 = scmp.eq.s32.totalorder %s23, 23
      %p106 = por %p104, %p105
      %p107 = scmp.ne.s32.totalorder %s99, %s102
      %p108 = scmp.eq.s32.totalorder %s23, 0
      %p109 = por %p107, %p108
      %p110 = scmp.ne.s32.totalorder %s99, %s102
      %p111 = scmp.eq.s32.totalorder %s28, 23
      %p112 = por %p110, %p111
      %p113 = scmp.ne.s32.totalorder %s102, %s103
      %p114 = scmp.eq.s32.totalorder %s28, 0
      %p115 = por %p113, %p114
      %p116 = scmp.ne.s32.totalorder %s102, %s103
      %p117 = scmp.eq.s32.totalorder %s29, 23
      %p118 = por %p116, %p117
      %p120 = scmp.ne.s32.totalorder %s103, %s119
      %p121 = scmp.eq.s32.totalorder %s29, 0
      %p122 = por %p120, %p121
      %s123 = ssub.s32 %s30, %s42
      %s124 = ssub.s32 %s31, %s38
      %s125 = sor.u32 %s123, %s124
      %p126 = scmp.eq.s32.totalorder %s125, 0
      %s128 = sadd.s32 %s127, 1
      %s129 = scalar_select %p126, %s127, %s128
      %p132 = pneg %p126
      %p133 = scmp.eq.s32.totalorder %s23, 23
      %p134 = por %p132, %p133
      %p135 = scmp.ne.s32.totalorder %s127, %s130
      %p136 = scmp.eq.s32.totalorder %s23, 0
      %p137 = por %p135, %p136
      %p138 = scmp.ne.s32.totalorder %s127, %s130
      %p139 = scmp.eq.s32.totalorder %s28, 23
      %p140 = por %p138, %p139
      %p141 = scmp.ne.s32.totalorder %s130, %s131
      %p142 = scmp.eq.s32.totalorder %s28, 0
      %p143 = por %p141, %p142
      %p144 = scmp.ne.s32.totalorder %s130, %s131
      %p145 = scmp.eq.s32.totalorder %s29, 23
      %p146 = por %p144, %p145
      %p148 = scmp.ne.s32.totalorder %s131, %s147
      %p149 = scmp.eq.s32.totalorder %s29, 0
      %p150 = por %p148, %p149
      %s151 = ssub.s32 %s30, %s42
      %s152 = ssub.s32 %s31, %s38
      %s153 = sor.u32 %s151, %s152
      %p154 = scmp.eq.s32.totalorder %s153, 0
      %s156 = sadd.s32 %s155, 1
      %s157 = scalar_select %p154, %s155, %s156
      %p160 = pneg %p154
      %p161 = scmp.eq.s32.totalorder %s23, 23
      %p162 = por %p160, %p161
      %p163 = scmp.ne.s32.totalorder %s155, %s158
      %p164 = scmp.eq.s32.totalorder %s23, 0
      %p165 = por %p163, %p164
      %p166 = scmp.ne.s32.totalorder %s155, %s158
      %p167 = scmp.eq.s32.totalorder %s28, 23
      %p168 = por %p166, %p167
      %p169 = scmp.ne.s32.totalorder %s158, %s159
      %p170 = scmp.eq.s32.totalorder %s28, 0
      %p171 = por %p169, %p170
      %p172 = scmp.ne.s32.totalorder %s158, %s159
      %p173 = scmp.eq.s32.totalorder %s29, 23
      %p174 = por %p172, %p173
      %p176 = scmp.ne.s32.totalorder %s159, %s175
      %p177 = scmp.eq.s32.totalorder %s29, 0
      %p178 = por %p176, %p177
      %p179 = scmp.le.s32.totalorder 1, %s23
      %p180 = scmp.lt.s32.totalorder %s23, 25
      %p181 = pnand %p179, %p180
      %p182 = pneg %p181
      // Predicated region
      $region9: #{tpu_custom_call.1} parent=5 // pred_check
        _
      $region10: #{tpu_custom_call.1} parent=5 // pred_check_branch
        %184 = sbr.rel (%p181) target = $region12
      $region11: #{tpu_custom_call.1} parent=5 // pred_region
        %s185 = ssub.s32 %s23, 1
      $region12: #{tpu_custom_call.1} parent=5 // pred_fallthru
        _
      %p186 = scmp.lt.s32.totalorder %s23, 24
      // Predicated region
      $region13: #{tpu_custom_call.1} parent=5 // pred_check
        %p187 = pneg %p186
      $region14: #{tpu_custom_call.1} parent=5 // pred_check_branch
        %189 = sbr.rel (%p187) target = $region16
      $region15: #{tpu_custom_call.1} parent=5 // pred_region
        // Predicated region
        $region17: #{tpu_custom_call.1} parent=15 // pred_check
          %p190 = pneg %p57
        $region18: #{tpu_custom_call.1} parent=15 // pred_check_branch
          %192 = sbr.rel (%p190) target = $region20
        $region19: #{tpu_custom_call.1} parent=15 // pred_region
          %s193 = sand.u32 %s47, 1
          %s194 = scalar_lea.sflag [#allocation3], %s193
          %s195 = sand.u32 %s47, 1
          %s196 = smul.addr %s195, 2
          %s197 = scalar_lea.vmem [#allocation2], %s196
          %s199 = ssub.s32 32, 32
          %200 = vsyncadd %s194, %s199
          %s201 = smul.addr %s31, 2
          %s202 = smul.addr %s30, 24
          %s203 = sadd.s32 %s201, %s202
          %s204 = smul.addr %s203, 16
          %s205 = scalar_lea.hbm %s0, %s204
          %s207 = sshll.u32 %s197, 4
          %s208 = int_to_ptr.vmem [resolvable:$true] %s207
          %210 = dma.hbm_to_vmem [thread:$0]  %s205, 32, %s208, %s194
        $region20: #{tpu_custom_call.1} parent=15 // pred_fallthru
          _
        // Predicated region
        $region21: #{tpu_custom_call.1} parent=15 // pred_check
          %p211 = pneg %p83
        $region22: #{tpu_custom_call.1} parent=15 // pred_check_branch
          %213 = sbr.rel (%p211) target = $region24
        $region23: #{tpu_custom_call.1} parent=15 // pred_region
          %s214 = sand.u32 %s23, 1
          %s215 = scalar_lea.sflag [#allocation6], %s214
          %s216 = sand.u32 %s73, 1
          %s217 = smul.addr %s216, 2
          %s218 = scalar_lea.vmem [#allocation5], %s217
          %s220 = ssub.s32 32, 32
          %221 = vsyncadd %s215, %s220
          %s222 = smul.addr %s30, 2
          %s223 = smul.addr %s222, 16
          %s224 = scalar_lea.hbm %s1, %s223
          %s226 = sshll.u32 %s218, 4
          %s227 = int_to_ptr.vmem [resolvable:$true] %s226
          %229 = dma.hbm_to_vmem [thread:$0]  %s224, 32, %s227, %s215
        $region24: #{tpu_custom_call.1} parent=15 // pred_fallthru
          _
        // Predicated region
        $region25: #{tpu_custom_call.1} parent=15 // pred_check
          %p230 = pneg %p109
        $region26: #{tpu_custom_call.1} parent=15 // pred_check_branch
          %232 = sbr.rel (%p230) target = $region28
        $region27: #{tpu_custom_call.1} parent=15 // pred_region
          %s233 = sand.u32 %s23, 1
          %s234 = scalar_lea.sflag [#allocation6], %s233
          %s235 = sand.u32 %s99, 1
          %s236 = smul.addr %s235, 2
          %s237 = scalar_lea.vmem [#allocation7], %s236
          %s239 = ssub.s32 32, 32
          %240 = vsyncadd %s234, %s239
          %s241 = smul.addr %s30, 2
          %s242 = smul.addr %s241, 16
          %s243 = scalar_lea.hbm %s2, %s242
          %s245 = sshll.u32 %s237, 4
          %s246 = int_to_ptr.vmem [resolvable:$true] %s245
          %248 = dma.hbm_to_vmem [thread:$0]  %s243, 32, %s246, %s234
        $region28: #{tpu_custom_call.1} parent=15 // pred_fallthru
          _
      $region16: #{tpu_custom_call.1} parent=5 // pred_fallthru
        _
      %p249 = scmp.le.s32.totalorder 1, %s23
      %p250 = scmp.lt.s32.totalorder %s23, 25
      %p251 = pnand %p249, %p250
      %p252 = pneg %p251
      // Predicated region
      $region29: #{tpu_custom_call.1} parent=5 // pred_check
        _
      $region30: #{tpu_custom_call.1} parent=5 // pred_check_branch
        %254 = sbr.rel (%p251) target = $region32
      $region31: #{tpu_custom_call.1} parent=5 // pred_region
        %s255 = ssub.s32 %s23, 1
        %s256 = sand.u32 %s50, 1
        %s257 = scalar_lea.sflag [#allocation3], %s256
        %s258 = sand.u32 %s50, 1
        %s259 = smul.addr %s258, 2
        %s260 = scalar_lea.vmem [#allocation2], %s259
        // Predicated region
        $region33: #{tpu_custom_call.1} parent=31 // pred_check
          %p261 = pneg %p63
        $region34: #{tpu_custom_call.1} parent=31 // pred_check_branch
          %263 = sbr.rel (%p261) target = $region36
        $region35: #{tpu_custom_call.1} parent=31 // pred_region
          %264 = dma.done %s257, 32
        $region36: #{tpu_custom_call.1} parent=31 // pred_fallthru
          _
        %s265 = sand.u32 %s28, 1
        %s266 = scalar_lea.sflag [#allocation6], %s265
        %s267 = sand.u32 %s76, 1
        %s268 = smul.addr %s267, 2
        %s269 = scalar_lea.vmem [#allocation5], %s268
        // Predicated region
        $region37: #{tpu_custom_call.1} parent=31 // pred_check
          %p270 = pneg %p89
        $region38: #{tpu_custom_call.1} parent=31 // pred_check_branch
          %272 = sbr.rel (%p270) target = $region40
        $region39: #{tpu_custom_call.1} parent=31 // pred_region
          %273 = dma.done %s266, 32
        $region40: #{tpu_custom_call.1} parent=31 // pred_fallthru
          _
        %s274 = sand.u32 %s28, 1
        %s275 = scalar_lea.sflag [#allocation6], %s274
        %s276 = sand.u32 %s102, 1
        %s277 = smul.addr %s276, 2
        %s278 = scalar_lea.vmem [#allocation7], %s277
        // Predicated region
        $region41: #{tpu_custom_call.1} parent=31 // pred_check
          %p279 = pneg %p115
        $region42: #{tpu_custom_call.1} parent=31 // pred_check_branch
          %281 = sbr.rel (%p279) target = $region44
        $region43: #{tpu_custom_call.1} parent=31 // pred_region
          %282 = dma.done %s275, 32
        $region44: #{tpu_custom_call.1} parent=31 // pred_fallthru
          _
        %s283 = sand.u32 %s50, 1
        %s284 = scalar_lea.sflag [#allocation3], %s283
        %s285 = sand.u32 %s50, 1
        %s286 = smul.addr %s285, 2
        %s287 = scalar_lea.vmem [#allocation2], %s286
        %p288 = pneg %p63
        %p289 = pneg %p60
        %s290 = sand.u32 %s28, 1
        %s291 = scalar_lea.sflag [#allocation6], %s290
        %s292 = sand.u32 %s76, 1
        %s293 = smul.addr %s292, 2
        %s294 = scalar_lea.vmem [#allocation5], %s293
        %p295 = pneg %p89
        %p296 = pneg %p86
        %s297 = sand.u32 %s28, 1
        %s298 = scalar_lea.sflag [#allocation6], %s297
        %s299 = sand.u32 %s102, 1
        %s300 = smul.addr %s299, 2
        %s301 = scalar_lea.vmem [#allocation7], %s300
        %p302 = pneg %p115
        %p303 = pneg %p112
        %p304 = pneg %p143
        %p305 = pneg %p140
        %s306 = sand.u32 %s130, 1
        %s307 = scalar_lea.sflag [#allocation4], %s306
        %s308 = sand.u32 %s130, 1
        %s309 = smul.addr %s308, 2
        %s310 = scalar_lea.vmem [#allocation8], %s309
        %p311 = pneg %p171
        %p312 = pneg %p168
        %s313 = sand.u32 %s158, 1
        %s314 = scalar_lea.sflag [#allocation10], %s313
        %s315 = sand.u32 %s158, 1
        %s316 = smul.addr %s315, 2
        %s317 = scalar_lea.vmem [#allocation9], %s316
        %v318 = vld [vmem:[%s269] sm:$0x3]
        %v319 = vld [vmem:[%s278] sm:$0x3]
        %vm320 = vcmp.eq.s32.totalorder %v318, 255
        %v321 = vsel %vm320, 0, %v318
        %vm322 = vcmp.eq.s32.totalorder %v318, 1
        %vm323 = vcmp.eq.s32.totalorder %v318, 2
        %vm324 = vmor %vm322, %vm323
        %vm325 = vcmp.eq.s32.totalorder %v318, 3
        %vm326 = vmor %vm324, %vm325
        %vm327 = vcmp.eq.s32.totalorder %v318, 4
        %vm328 = vmor %vm326, %vm327
        %vm329 = vcmp.eq.s32.totalorder %v318, 5
        %vm330 = vcmp.eq.s32.totalorder %v318, 6
        %vm331 = vmor %vm329, %vm330
        %v332 = vsel %vm331, 2, 0
        %v333 = vsel %vm328, 1, %v332
        %vm334 = vcmp.gt.s32.totalorder %v318, 0
        %vm335 = vmxor %vm320, 1
        %vm336 = vmand %vm334, %vm335
        %v337 = vsel %vm336, 1, 0
        %p338 = scmp.lt.s32.totalorder %s33, 7
        %p339 = scmp.ge.s32.totalorder %s33, 7
        %p340 = scmp.lt.s32.totalorder %s33, 10
        %p341 = pnand %p339, %p340
        %p342 = pneg %p341
        %s343 = scalar_select %p342, 1, 0
        %v344 = vstv %s343
        %vm345 = vcmp.eq.s32.totalorder %v344, 1
        %v346 = vsel %vm345, %v333, %v337
        %s347 = scalar_select %p338, 1, 0
        %v348 = vstv %s347
        %vm349 = vcmp.eq.s32.totalorder %v348, 1
        %v350 = vsel %vm349, %v321, %v346
        %s351 = ssub.s32 %s33, 7
        %s352 = ssub.s32 %s33, 10
        %s353 = scalar_select %p342, %s351, %s352
        %s354 = scalar_select %p338, %s33, %s353
        %v355 = vstv %s354
        %vm356 = vcmp.eq.s32.totalorder %v350, %v355
        %v357 = vsel %vm356, 1, 0
        %v358 = vcvt.s32.f32 %v357
        %v359 = vld [vmem:[%s260] sm:$0x3]
        %v360 = vxor.u32 %v359, 2147483648
        %v361 = vmul.f32 %v360, 1.442695
        %v362 = vpow.pop %v361
        %v363 = vadd.f32 %v362, 1.0
        %v364 = vrcp.pop %v363
        %v365 = vmul.f32 1.0, %v364
        %v366 = vmul.f32 %v365, %v319
        %v367 = vadd.f32 %v366, 1e-06
        %v368 = vlaneseq
        %vm369 = vcmp.ge.s32.totalorder %v368, 0
        %vm370 = vcmp.lt.s32.totalorder %v368, 256
        %vm371 = vmand %vm369, %vm370
        %372 = vst.msk [vmem:[%s310] sm:$0x3] %vm371, %v367
        %v373 = vmul.f32 %v358, %v319
        %374 = vst.msk [vmem:[%s317] sm:$0x3] %vm371, %v373
        %s375 = sand.u32 %s130, 1
        %s376 = scalar_lea.sflag [#allocation4], %s375
        %s377 = sand.u32 %s130, 1
        %s378 = smul.addr %s377, 2
        %s379 = scalar_lea.vmem [#allocation8], %s378
        %s380 = sand.u32 %s158, 1
        %s381 = scalar_lea.sflag [#allocation10], %s380
        %s382 = sand.u32 %s158, 1
        %s383 = smul.addr %s382, 2
        %s384 = scalar_lea.vmem [#allocation9], %s383
        // Predicated region
        $region45: #{tpu_custom_call.1} parent=31 // pred_check
          %p385 = pneg %p140
        $region46: #{tpu_custom_call.1} parent=31 // pred_check_branch
          %387 = sbr.rel (%p385) target = $region48
        $region47: #{tpu_custom_call.1} parent=31 // pred_region
          %s389 = ssub.s32 32, 32
          %390 = vsyncadd %s376, %s389
          %s391 = smul.addr %s33, 2
          %s392 = smul.addr %s32, 24
          %s393 = sadd.s32 %s391, %s392
          %s394 = smul.addr %s393, 16
          %s395 = scalar_lea.hbm %s3, %s394
          %s397 = sshll.u32 %s379, 4
          %s398 = int_to_ptr.vmem [resolvable:$true] %s397
          %400 = dma.vmem_to_hbm [thread:$0]  %s398, 32, %s395, %s376
        $region48: #{tpu_custom_call.1} parent=31 // pred_fallthru
          _
        // Predicated region
        $region49: #{tpu_custom_call.1} parent=31 // pred_check
          %p401 = pneg %p168
        $region50: #{tpu_custom_call.1} parent=31 // pred_check_branch
          %403 = sbr.rel (%p401) target = $region52
        $region51: #{tpu_custom_call.1} parent=31 // pred_region
          %s405 = ssub.s32 32, 32
          %406 = vsyncadd %s381, %s405
          %s407 = smul.addr %s33, 2
          %s408 = smul.addr %s32, 24
          %s409 = sadd.s32 %s407, %s408
          %s410 = smul.addr %s409, 16
          %s411 = scalar_lea.hbm %s4, %s410
          %s413 = sshll.u32 %s384, 4
          %s414 = int_to_ptr.vmem [resolvable:$true] %s413
          %416 = dma.vmem_to_hbm [thread:$0]  %s414, 32, %s411, %s381
        $region52: #{tpu_custom_call.1} parent=31 // pred_fallthru
          _
      $region32: #{tpu_custom_call.1} parent=5 // pred_fallthru
        _
      %p417 = scmp.le.s32.totalorder 2, %s23
      // Predicated region
      $region53: #{tpu_custom_call.1} parent=5 // pred_check
        %p418 = pneg %p417
      $region54: #{tpu_custom_call.1} parent=5 // pred_check_branch
        %420 = sbr.rel (%p418) target = $region56
      $region55: #{tpu_custom_call.1} parent=5 // pred_region
        %s421 = ssub.s32 %s23, 2
        // Predicated region
        $region57: #{tpu_custom_call.1} parent=55 // pred_check
          %p422 = pneg %p146
        $region58: #{tpu_custom_call.1} parent=55 // pred_check_branch
          %424 = sbr.rel (%p422) target = $region60
        $region59: #{tpu_custom_call.1} parent=55 // pred_region
          %s425 = sand.u32 %s131, 1
          %s426 = scalar_lea.sflag [#allocation4], %s425
          %s427 = sand.u32 %s131, 1
          %s428 = smul.addr %s427, 2
          %s429 = scalar_lea.vmem [#allocation8], %s428
          %430 = dma.done %s426, 32
        $region60: #{tpu_custom_call.1} parent=55 // pred_fallthru
          _
        // Predicated region
        $region61: #{tpu_custom_call.1} parent=55 // pred_check
          %p431 = pneg %p174
        $region62: #{tpu_custom_call.1} parent=55 // pred_check_branch
          %433 = sbr.rel (%p431) target = $region64
        $region63: #{tpu_custom_call.1} parent=55 // pred_region
          %s434 = sand.u32 %s159, 1
          %s435 = scalar_lea.sflag [#allocation10], %s434
          %s436 = sand.u32 %s159, 1
          %s437 = smul.addr %s436, 2
          %s438 = scalar_lea.vmem [#allocation9], %s437
          %439 = dma.done %s435, 32
        $region64: #{tpu_custom_call.1} parent=55 // pred_fallthru
          _
      $region56: #{tpu_custom_call.1} parent=5 // pred_fallthru
        _
    $region6: #{tpu_custom_call.1} parent=1 // loop_footer
      %s27 = sadd.s32 1, %s23
    $region7: #{tpu_custom_call.1} parent=1 // loop_footer_branch
      %22 = sbr.rel target = $region3
    $region8: #{tpu_custom_call.1} parent=1 // loop_exit
      _
    %440 = vsyncpa [#allocation3], 1
    %s441 = scalar_lea.sflag [#allocation3], 1
    %442 = vsyncpa %s441, 1
    %443 = vsyncpa [#allocation6], 1
    %s444 = scalar_lea.sflag [#allocation6], 1
    %445 = vsyncpa %s444, 1
    %446 = vsyncpa [#allocation4], 1
    %s447 = scalar_lea.sflag [#allocation4], 1
    %448 = vsyncpa %s447, 1
    %449 = vsyncpa [#allocation10], 1
    %s450 = scalar_lea.sflag [#allocation10], 1
    %451 = vsyncpa %s450, 1

</llo_original>
